<compile_context>
chip_gen: v7x
topology: tpu7x:2x2x1
jax: 0.10.0
libtpu: 0.0.40
codegen_flags: <defaults>
</compile_context>

<pallas_src>
import jax
import jax.numpy as jnp
from jax import lax
from jax.experimental import pallas as pl
from jax.experimental.pallas import tpu as pltpu


def _round_up(v, m):
    return ((v + m - 1) // m) * m


def cnn_block(x, w_conv, b_conv, w_lin, gamma, beta, kernel_size, *,
              matmul_dtype=jnp.bfloat16, time_tile=None):
    """CNNblock forward (eval mode).

    x      : (B, T, H)   activations (f32 or bf16)
    w_conv : (H, H, K)   torch Conv1d weight (out, in, k)
    b_conv : (H,)        Conv1d bias
    w_lin  : (H, H)      torch Linear weight (out, in), no bias
    gamma, beta : (H,)   LayerNorm affine
    """
    B, T, H = x.shape
    K = int(kernel_size)
    x_dtype = x.dtype
    mm_dtype = jnp.dtype(matmul_dtype)
    x_bytes = jnp.dtype(x_dtype).itemsize
    mm_bytes = mm_dtype.itemsize

    # ---- fold Linear into the conv taps (dropout is identity at inference) --
    #   conv_t = sum_k x[t-(K-1)+k] @ Wc_k^T + b_c ;  y_t = conv_t @ Wl^T
    #   => y_t = sum_k x[t-(K-1)+k] @ (Wc_k^T @ Wl^T) + (b_c @ Wl^T)
    w_fused = jnp.einsum('oik,po->kip',
                         w_conv.astype(jnp.float32),
                         w_lin.astype(jnp.float32)).astype(mm_dtype)   # (K,H,H)
    b_fused = (w_lin.astype(jnp.float32) @ b_conv.astype(jnp.float32)
               ).reshape(1, H)                                          # f32
    gamma2 = gamma.reshape(1, H).astype(jnp.float32)
    beta2 = beta.reshape(1, H).astype(jnp.float32)

    # halo region padded to a full 8-sublane group -> aligned full-tile store
    PAD = _round_up(K - 1, 8) if K > 1 else 0

    # ---- generation-aware VMEM budget ---------------------------------------
    try:
        vmem_cap = int(pltpu.get_tpu_info().vmem_capacity_bytes)
    except Exception:                       # conservative fallback (v7x-sized)
        vmem_cap = 64 << 20
    budget = max(16 << 20, int(0.75 * vmem_cap))   # ~48 MiB v7x, ~96 MiB v5e/v6e

    weight_bytes = K * H * H * mm_bytes + 3 * H * 4

    def est_vmem(tt):
        act = tt * H * x_bytes                            # one (tT, H) block
        win = (PAD + tt) * H * mm_bytes if K > 1 else 0
        return 2 * act + 2 * act + 2 * weight_bytes + win  # dbl-buffered I/O

    if time_tile is None:
        cands = sorted(d for d in range(1, T + 1)
                       if T % d == 0 and (d % 8 == 0 or d == T))
        tT = cands[0]
        for d in cands:                       # biggest tile that fits budget;
            if est_vmem(d) <= budget:         # stop growing once >= 1024 rows
                tT = d
                if d >= 1024:
                    break
    else:
        tT = int(time_tile)
    assert T % tT == 0, "time_tile must divide T"
    assert tT % 8 == 0 or tT == T, "time tile must be 8-aligned (or full T)"
    if K > 1:
        assert tT >= K - 1, "time tile must cover the causal halo"

    vmem_limit = int(min(vmem_cap - (4 << 20), max(32 << 20, 2 * est_vmem(tT))))

    # ---- kernel body ---------------------------------------------------------
    def _ln_gate(y, x_f32, g, b):
        mean = jnp.mean(y, axis=-1, keepdims=True)
        var = jnp.mean((y - mean) ** 2, axis=-1, keepdims=True)
        y_n = (y - mean) * lax.rsqrt(var + 1e-5)
        return (y_n * g + b) * x_f32

    if K > 1:
        def kernel(x_ref, wf_ref, bf_ref, g_ref, b_ref, o_ref, xwin_ref):
            # x_ref : (tT, H)              current time-tile (batch squeezed)
            # xwin  : (PAD+tT, H) mm_dtype; rows [PAD-(K-1), PAD) = causal
            #         halo, rows [PAD, PAD+tT) = current tile.
            # NOTE: the carried halo requires the time axis to stay the
            # innermost, sequentially-executed ("arbitrary") grid axis and
            # scratch to be core-private.  Do not reorder the grid.
            t = pl.program_id(1)

            @pl.when(t == 0)
            def _():                      # causal zero-pad for the first tile
                xwin_ref[pl.ds(PAD - (K - 1), K - 1), :] = jnp.zeros(
                    (K - 1, H), mm_dtype)

            @pl.when(t > 0)
            def _():                      # previous tile's tail still in xwin
                tail = xwin_ref[pl.ds(PAD + tT - (K - 1), K - 1), :]
                xwin_ref[pl.ds(PAD - (K - 1), K - 1), :] = tail

            # single cast pass; 8-sublane-aligned full-tile store
            xwin_ref[pl.ds(PAD, tT), :] = x_ref[...].astype(mm_dtype)

            # causal conv (+ folded Linear) = K shifted MXU matmuls, f32 acc
            acc = jnp.zeros((tT, H), jnp.float32)
            for k in range(K):                          # K is small & static
                acc = acc + jnp.dot(
                    xwin_ref[pl.ds(PAD - (K - 1) + k, tT), :], wf_ref[k],
                    preferred_element_type=jnp.float32)
            y = acc + bf_ref[...]

            o_ref[...] = _ln_gate(y, x_ref[...].astype(jnp.float32),
                                  g_ref[...], b_ref[...]).astype(o_ref.dtype)

        scratch_shapes = [pltpu.VMEM((PAD + tT, H), mm_dtype)]
    else:
        # K == 1: no halo, no window scratch, one fused matmul.
        def kernel(x_ref, wf_ref, bf_ref, g_ref, b_ref, o_ref):
            y = jnp.dot(x_ref[...].astype(mm_dtype), wf_ref[0],
                        preferred_element_type=jnp.float32) + bf_ref[...]
            o_ref[...] = _ln_gate(y, x_ref[...].astype(jnp.float32),
                                  g_ref[...], b_ref[...]).astype(o_ref.dtype)

        scratch_shapes = []

    act_spec = pl.BlockSpec((pl.Squeezed(), tT, H), lambda b, t: (b, t, 0))
    grid_spec = pltpu.PrefetchScalarGridSpec(
        num_scalar_prefetch=0,
        grid=(B, T // tT),
        in_specs=[
            act_spec,                                            # x
            # TODO(synk): pipeline_mode=pl.Buffered(1) on the constant-index
            # weight specs would reclaim a little extra VMEM headroom on v7x.
            pl.BlockSpec((K, H, H), lambda b, t: (0, 0, 0)),     # fused weight
            pl.BlockSpec((1, H), lambda b, t: (0, 0)),           # fused bias
            pl.BlockSpec((1, H), lambda b, t: (0, 0)),           # gamma
            pl.BlockSpec((1, H), lambda b, t: (0, 0)),           # beta
        ],
        out_specs=act_spec,
        scratch_shapes=scratch_shapes,
    )

    return pl.pallas_call(
        kernel,
        out_shape=jax.ShapeDtypeStruct((B, T, H), x_dtype),
        grid_spec=grid_spec,
        compiler_params=pltpu.CompilerParams(
            dimension_semantics=("parallel", "arbitrary"),
            vmem_limit_bytes=vmem_limit),
    )(x, w_fused, b_fused, gamma2, beta2)


def cnn_block_reference(x, w_conv, b_conv, w_lin, gamma, beta, K):
    """Pure-JAX f32 reference mirroring the PyTorch module (eval mode)."""
    B, T, H = x.shape
    xf = x.astype(jnp.float32)
    xpad = jnp.pad(xf, ((0, 0), (K - 1, 0), (0, 0)))
    conv = jnp.broadcast_to(b_conv[None, None, :].astype(jnp.float32), (B, T, H))
    for k in range(K):
        conv = conv + jnp.einsum('bti,oi->bto', xpad[:, k:k + T, :],
                                 w_conv[:, :, k].astype(jnp.float32))
    y = jnp.einsum('bti,oi->bto', conv, w_lin.astype(jnp.float32))
    mean = jnp.mean(y, axis=-1, keepdims=True)
    var = jnp.mean((y - mean) ** 2, axis=-1, keepdims=True)
    y_n = (y - mean) / jnp.sqrt(var + 1e-5) * gamma + beta
    return y_n * xf


def cnn_block_reference_fused(x, w_conv, b_conv, w_lin, gamma, beta, K,
                              matmul_dtype=jnp.bfloat16):
    """Reference matching the kernel's fused-weight low-precision numerics."""
    B, T, H = x.shape
    mm = jnp.dtype(matmul_dtype)
    w_f = jnp.einsum('oik,po->kip', w_conv.astype(jnp.float32),
                     w_lin.astype(jnp.float32)).astype(mm)
    b_f = w_lin.astype(jnp.float32) @ b_conv.astype(jnp.float32)
    xpad = jnp.pad(x, ((0, 0), (K - 1, 0), (0, 0))).astype(mm)
    y = jnp.zeros((B, T, H), jnp.float32)
    for k in range(K):
        y = y + jnp.einsum('bti,io->bto', xpad[:, k:k + T, :], w_f[k],
                           preferred_element_type=jnp.float32)
    y = y + b_f[None, None, :]
    mean = jnp.mean(y, axis=-1, keepdims=True)
    var = jnp.mean((y - mean) ** 2, axis=-1, keepdims=True)
    y_n = (y - mean) / jnp.sqrt(var + 1e-5) * gamma + beta
    return y_n * x.astype(jnp.float32)


if __name__ == "__main__":
    # Small but lane-dense demo shapes (H multiple of 128, T multiple of 8).
    B, T, H, K = 4, 64, 128, 3
    drop_rate = 0.1  # TODO(synk): training-mode dropout would need pltpu.prng_* masking

    key = jax.random.PRNGKey(0)
    k_x, k_wc, k_bc, k_wl, k_g, k_b = jax.random.split(key, 6)

    x = jax.random.normal(k_x, (B, T, H), jnp.float32)
    # Conv1d weight (out_channels, in_channels, kernel_size) + bias
    w_conv = jax.random.normal(k_wc, (H, H, K), jnp.float32) * 0.1
    b_conv = jax.random.normal(k_bc, (H,), jnp.float32) * 0.1
    # Linear weight (out_features, in_features), no bias
    w_lin = jax.random.normal(k_wl, (H, H), jnp.float32) * 0.1
    # LayerNorm affine
    gamma = jnp.ones((H,), jnp.float32) + 0.01 * jax.random.normal(k_g, (H,))
    beta = 0.01 * jax.random.normal(k_b, (H,), jnp.float32)

    # 1) Exact f32 matmul path, with a forced small time tile so the carried
    #    causal-halo path (multiple time tiles per batch) is exercised.
    out_f32 = cnn_block(x, w_conv, b_conv, w_lin, gamma, beta, K,
                        matmul_dtype=jnp.float32, time_tile=16)
    out_f32 = jax.block_until_ready(out_f32)
    ref_f32 = cnn_block_reference(x, w_conv, b_conv, w_lin, gamma, beta, K)
    assert out_f32.shape == (B, T, H)
    assert jnp.allclose(out_f32, ref_f32, rtol=2e-4, atol=2e-4), \
        "f32 kernel mismatch vs reference"

    # 2) Default perf config: bf16 MXU operands / window scratch, f32 LN & gate,
    #    auto-picked time tile.
    out_bf16 = cnn_block(x, w_conv, b_conv, w_lin, gamma, beta, K)
    out_bf16 = jax.block_until_ready(out_bf16)
    ref_bf16 = cnn_block_reference_fused(x, w_conv, b_conv, w_lin, gamma, beta, K)
    assert jnp.allclose(out_bf16, ref_bf16, rtol=2e-3, atol=2e-3), \
        "bf16 kernel mismatch vs fused bf16 reference"

    # 3) bf16 activations end-to-end (halves HBM traffic); LN/gate stay f32.
    x_bf = x.astype(jnp.bfloat16)
    out_io = cnn_block(x_bf, w_conv, b_conv, w_lin, gamma, beta, K)
    out_io = jax.block_until_ready(out_io)
    ref_io = cnn_block_reference_fused(x_bf, w_conv, b_conv, w_lin, gamma, beta, K)
    assert out_io.dtype == jnp.bfloat16
    assert jnp.allclose(out_io.astype(jnp.float32), ref_io, rtol=2e-2, atol=2e-2), \
        "bf16-I/O kernel mismatch vs fused bf16 reference"

    print("KERNEL_OK")
</pallas_src>

<mosaic_0001>
module attributes {stable_mosaic.version = 11 : i64} {
  func.func @kernel(%arg0: i32, %arg1: i32, %arg2: memref<1x16x128xf32, #tpu.memory_space<vmem>>, %arg3: memref<3x128x128xf32, #tpu.memory_space<vmem>>, %arg4: memref<1x128xf32, #tpu.memory_space<vmem>>, %arg5: memref<1x128xf32, #tpu.memory_space<vmem>>, %arg6: memref<1x128xf32, #tpu.memory_space<vmem>>, %arg7: memref<1x16x128xf32, #tpu.memory_space<vmem>>, %arg8: memref<24x128xf32, #tpu.memory_space<vmem>>) attributes {dimension_semantics = [#tpu.dimension_semantics<parallel>, #tpu.dimension_semantics<arbitrary>], iteration_bounds = array<i64: 4, 4>, scalar_prefetch = 0 : i64, scratch_operands = 1 : i64, tpu.core_type = #tpu.core_type<tc>, window_params = [{transform_indices = @transform_0, window_bounds = array<i64: 1, 16, 128>}, {pipeline_mode = #tpu.pipeline_mode<synchronous>, transform_indices = @transform_1, window_bounds = array<i64: 3, 128, 128>}, {pipeline_mode = #tpu.pipeline_mode<synchronous>, transform_indices = @transform_2, window_bounds = array<i64: 1, 128>}, {pipeline_mode = #tpu.pipeline_mode<synchronous>, transform_indices = @transform_3, window_bounds = array<i64: 1, 128>}, {pipeline_mode = #tpu.pipeline_mode<synchronous>, transform_indices = @transform_4, window_bounds = array<i64: 1, 128>}, {transform_indices = @transform_5, window_bounds = array<i64: 1, 16, 128>}]} {
    %c0_i32 = arith.constant 0 : i32
    %0 = arith.cmpi eq, %arg1, %c0_i32 : i32
    %1 = arith.extui %0 : i1 to i32
    %c0_i32_0 = arith.constant 0 : i32
    %2 = arith.cmpi ne, %1, %c0_i32_0 : i32
    scf.if %2 {
      %cst_37 = arith.constant 0.000000e+00 : f32
      %58 = vector.broadcast %cst_37 : f32 to vector<2x128xf32>
      %c6_38 = arith.constant 6 : index
      %c0_39 = arith.constant 0 : index
      %59 = vector.load %arg8[%c6_38, %c0_39] : memref<24x128xf32, #tpu.memory_space<vmem>>, vector<2x128xf32>
      tpu.vector_store %arg8[%c6_38, %c0_39], %58 {strides = array<i32>} : memref<24x128xf32, #tpu.memory_space<vmem>>, vector<2x128xf32>,
    } else {
    }
    %c0_i32_1 = arith.constant 0 : i32
    %3 = arith.cmpi sgt, %arg1, %c0_i32_1 : i32
    %4 = arith.extui %3 : i1 to i32
    %c0_i32_2 = arith.constant 0 : i32
    %5 = arith.cmpi ne, %4, %c0_i32_2 : i32
    scf.if %5 {
      %c22 = arith.constant 22 : index
      %c0_37 = arith.constant 0 : index
      %58 = vector.load %arg8[%c22, %c0_37] : memref<24x128xf32, #tpu.memory_space<vmem>>, vector<2x128xf32>
      %c6_38 = arith.constant 6 : index
      %c0_39 = arith.constant 0 : index
      %59 = vector.load %arg8[%c6_38, %c0_39] : memref<24x128xf32, #tpu.memory_space<vmem>>, vector<2x128xf32>
      tpu.vector_store %arg8[%c6_38, %c0_39], %58 {strides = array<i32>} : memref<24x128xf32, #tpu.memory_space<vmem>>, vector<2x128xf32>,
    } else {
    }
    %c0 = arith.constant 0 : index
    %c0_3 = arith.constant 0 : index
    %c0_4 = arith.constant 0 : index
    %6 = vector.load %arg2[%c0, %c0_3, %c0_4] : memref<1x16x128xf32, #tpu.memory_space<vmem>>, vector<1x16x128xf32>
    %7 = vector.shape_cast %6 : vector<1x16x128xf32> to vector<16x128xf32>
    %c8 = arith.constant 8 : index
    %c0_5 = arith.constant 0 : index
    %8 = vector.load %arg8[%c8, %c0_5] : memref<24x128xf32, #tpu.memory_space<vmem>>, vector<16x128xf32>
    tpu.vector_store %arg8[%c8, %c0_5], %7 {strides = array<i32>} : memref<24x128xf32, #tpu.memory_space<vmem>>, vector<16x128xf32>,
    %cst = arith.constant 0.000000e+00 : f32
    %9 = vector.broadcast %cst : f32 to vector<16x128xf32>
    %c6 = arith.constant 6 : index
    %c0_6 = arith.constant 0 : index
    %10 = vector.load %arg8[%c6, %c0_6] : memref<24x128xf32, #tpu.memory_space<vmem>>, vector<16x128xf32>
    %c0_7 = arith.constant 0 : index
    %c0_8 = arith.constant 0 : index
    %c0_9 = arith.constant 0 : index
    %11 = vector.load %arg3[%c0_7, %c0_8, %c0_9] : memref<3x128x128xf32, #tpu.memory_space<vmem>>, vector<1x128x128xf32>
    %12 = vector.shape_cast %11 : vector<1x128x128xf32> to vector<128x128xf32>
    %cst_10 = arith.constant dense<0.000000e+00> : vector<16x128xf32>
    %13 = tpu.matmul %10, %12, %cst_10 {dimension_numbers = #tpu.dot_dimension_numbers<[1], [0], [0], [1], [0, 0, 1, 1], [], []>} : vector<16x128xf32>, vector<128x128xf32>, vector<16x128xf32> -> vector<16x128xf32>
    %14 = arith.addf %9, %13 : vector<16x128xf32>
    %c7 = arith.constant 7 : index
    %c0_11 = arith.constant 0 : index
    %15 = vector.load %arg8[%c7, %c0_11] : memref<24x128xf32, #tpu.memory_space<vmem>>, vector<16x128xf32>
    %c1 = arith.constant 1 : index
    %c0_12 = arith.constant 0 : index
    %c0_13 = arith.constant 0 : index
    %16 = vector.load %arg3[%c1, %c0_12, %c0_13] : memref<3x128x128xf32, #tpu.memory_space<vmem>>, vector<1x128x128xf32>
    %17 = vector.shape_cast %16 : vector<1x128x128xf32> to vector<128x128xf32>
    %cst_14 = arith.constant dense<0.000000e+00> : vector<16x128xf32>
    %18 = tpu.matmul %15, %17, %cst_14 {dimension_numbers = #tpu.dot_dimension_numbers<[1], [0], [0], [1], [0, 0, 1, 1], [], []>} : vector<16x128xf32>, vector<128x128xf32>, vector<16x128xf32> -> vector<16x128xf32>
    %19 = arith.addf %14, %18 : vector<16x128xf32>
    %c8_15 = arith.constant 8 : index
    %c0_16 = arith.constant 0 : index
    %20 = vector.load %arg8[%c8_15, %c0_16] : memref<24x128xf32, #tpu.memory_space<vmem>>, vector<16x128xf32>
    %c2 = arith.constant 2 : index
    %c0_17 = arith.constant 0 : index
    %c0_18 = arith.constant 0 : index
    %21 = vector.load %arg3[%c2, %c0_17, %c0_18] : memref<3x128x128xf32, #tpu.memory_space<vmem>>, vector<1x128x128xf32>
    %22 = vector.shape_cast %21 : vector<1x128x128xf32> to vector<128x128xf32>
    %cst_19 = arith.constant dense<0.000000e+00> : vector<16x128xf32>
    %23 = tpu.matmul %20, %22, %cst_19 {dimension_numbers = #tpu.dot_dimension_numbers<[1], [0], [0], [1], [0, 0, 1, 1], [], []>} : vector<16x128xf32>, vector<128x128xf32>, vector<16x128xf32> -> vector<16x128xf32>
    %24 = arith.addf %19, %23 : vector<16x128xf32>
    %c0_20 = arith.constant 0 : index
    %c0_21 = arith.constant 0 : index
    %25 = vector.load %arg4[%c0_20, %c0_21] : memref<1x128xf32, #tpu.memory_space<vmem>>, vector<1x128xf32>
    %26 = vector.broadcast %25 : vector<1x128xf32> to vector<16x128xf32>
    %27 = arith.addf %24, %26 : vector<16x128xf32>
    %c0_22 = arith.constant 0 : index
    %c0_23 = arith.constant 0 : index
    %c0_24 = arith.constant 0 : index
    %28 = vector.load %arg2[%c0_22, %c0_23, %c0_24] : memref<1x16x128xf32, #tpu.memory_space<vmem>>, vector<1x16x128xf32>
    %29 = vector.shape_cast %28 : vector<1x16x128xf32> to vector<16x128xf32>
    %c0_25 = arith.constant 0 : index
    %c0_26 = arith.constant 0 : index
    %30 = vector.load %arg5[%c0_25, %c0_26] : memref<1x128xf32, #tpu.memory_space<vmem>>, vector<1x128xf32>
    %c0_27 = arith.constant 0 : index
    %c0_28 = arith.constant 0 : index
    %31 = vector.load %arg6[%c0_27, %c0_28] : memref<1x128xf32, #tpu.memory_space<vmem>>, vector<1x128xf32>
    %cst_29 = arith.constant dense<0.000000e+00> : vector<16xf32>
    %32 = vector.multi_reduction <add>, %27, %cst_29 [1] : vector<16x128xf32> to vector<16xf32>
    %33 = vector.shape_cast %32 : vector<16xf32> to vector<16x1xf32>
    %cst_30 = arith.constant 1.280000e+02 : f32
    %34 = vector.broadcast %cst_30 : f32 to vector<16x1xf32>
    %35 = arith.divf %33, %34 : vector<16x1xf32>
    %36 = vector.broadcast %35 : vector<16x1xf32> to vector<16x128xf32>
    %37 = arith.subf %27, %36 : vector<16x128xf32>
    %38 = arith.mulf %37, %37 : vector<16x128xf32>
    %cst_31 = arith.constant dense<0.000000e+00> : vector<16xf32>
    %39 = vector.multi_reduction <add>, %38, %cst_31 [1] : vector<16x128xf32> to vector<16xf32>
    %40 = vector.shape_cast %39 : vector<16xf32> to vector<16x1xf32>
    %cst_32 = arith.constant 1.280000e+02 : f32
    %41 = vector.broadcast %cst_32 : f32 to vector<16x1xf32>
    %42 = arith.divf %40, %41 : vector<16x1xf32>
    %43 = vector.broadcast %35 : vector<16x1xf32> to vector<16x128xf32>
    %44 = arith.subf %27, %43 : vector<16x128xf32>
    %cst_33 = arith.constant 9.99999974E-6 : f32
    %45 = vector.broadcast %cst_33 : f32 to vector<16x1xf32>
    %46 = arith.addf %42, %45 : vector<16x1xf32>
    %47 = math.rsqrt %46 : vector<16x1xf32>
    %48 = vector.broadcast %47 : vector<16x1xf32> to vector<16x128xf32>
    %49 = arith.mulf %44, %48 : vector<16x128xf32>
    %50 = vector.broadcast %30 : vector<1x128xf32> to vector<16x128xf32>
    %51 = arith.mulf %49, %50 : vector<16x128xf32>
    %52 = vector.broadcast %31 : vector<1x128xf32> to vector<16x128xf32>
    %53 = arith.addf %51, %52 : vector<16x128xf32>
    %54 = arith.mulf %53, %29 : vector<16x128xf32>
    %c0_34 = arith.constant 0 : index
    %c0_35 = arith.constant 0 : index
    %c0_36 = arith.constant 0 : index
    %55 = vector.load %arg7[%c0_34, %c0_35, %c0_36] : memref<1x16x128xf32, #tpu.memory_space<vmem>>, vector<1x16x128xf32>
    %56 = vector.shape_cast %55 : vector<1x16x128xf32> to vector<16x128xf32>
    %57 = vector.shape_cast %54 : vector<16x128xf32> to vector<1x16x128xf32>
    tpu.vector_store %arg7[%c0_34, %c0_35, %c0_36], %57 {strides = array<i32>} : memref<1x16x128xf32, #tpu.memory_space<vmem>>, vector<1x16x128xf32>,
    return
  }
  func.func @transform_0(%arg0: i32, %arg1: i32) -> (i32, i32, i32) {
    %c0_i32 = arith.constant 0 : i32
    %c0_i32_0 = arith.constant 0 : i32
    return %arg0, %arg1, %c0_i32 : i32, i32, i32
  }
  func.func @transform_1(%arg0: i32, %arg1: i32) -> (i32, i32, i32) {
    %c0_i32 = arith.constant 0 : i32
    %c0_i32_0 = arith.constant 0 : i32
    %c0_i32_1 = arith.constant 0 : i32
    %c0_i32_2 = arith.constant 0 : i32
    return %c0_i32, %c0_i32_0, %c0_i32_1 : i32, i32, i32
  }
  func.func @transform_2(%arg0: i32, %arg1: i32) -> (i32, i32) {
    %c0_i32 = arith.constant 0 : i32
    %c0_i32_0 = arith.constant 0 : i32
    %c0_i32_1 = arith.constant 0 : i32
    return %c0_i32, %c0_i32_0 : i32, i32
  }
  func.func @transform_3(%arg0: i32, %arg1: i32) -> (i32, i32) {
    %c0_i32 = arith.constant 0 : i32
    %c0_i32_0 = arith.constant 0 : i32
    %c0_i32_1 = arith.constant 0 : i32
    return %c0_i32, %c0_i32_0 : i32, i32
  }
  func.func @transform_4(%arg0: i32, %arg1: i32) -> (i32, i32) {
    %c0_i32 = arith.constant 0 : i32
    %c0_i32_0 = arith.constant 0 : i32
    %c0_i32_1 = arith.constant 0 : i32
    return %c0_i32, %c0_i32_0 : i32, i32
  }
  func.func @transform_5(%arg0: i32, %arg1: i32) -> (i32, i32, i32) {
    %c0_i32 = arith.constant 0 : i32
    %c0_i32_0 = arith.constant 0 : i32
    return %arg0, %arg1, %c0_i32 : i32, i32, i32
  }
}

</mosaic_0001>

<llo_original>
// kernel: tpu_custom_call.1
$region0: #{tpu_custom_call.1}
  #allocation0 [shape = 'u32[]', space=smem, size = 0x4, offset = 0x4, fixed_abs, tag = 'smem constant byte address 0x4 - core index']
  #allocation1 [shape = 'u32[144,128]{1,0:T(1,128)}', space=vmem, size = 0x12000, scoped, tag = 'internal scratch']
  #allocation2 [shape = 'f32[24,128]{1,0:T(8,128)}', space=vmem, size = 0x3000, scoped, tag = 'scratch operand']
  %s0 = inlined_call_operand.hbm [shape: f32[4,64,128], index: 0, kind: input, shape index: {}]
  %s1 = inlined_call_operand.hbm [shape: f32[3,128,128], index: 1, kind: input, shape index: {}]
  %s2 = inlined_call_operand.vmem [shape: f32[1,128], index: 2, kind: input, shape index: {}]
  %s3 = inlined_call_operand.vmem [shape: f32[1,128], index: 3, kind: input, shape index: {}]
  %s4 = inlined_call_operand.vmem [shape: f32[1,128], index: 4, kind: input, shape index: {}]
  %s5 = inlined_call_operand.hbm [shape: f32[4,64,128], index: 5, kind: output, shape index: {}]
  %s6 = sld [smem:[#allocation0]]
  $region69: #{tpu_custom_call.1} parent=0
    _
  %s8 = ssub.s32 1, %s6
  %s9 = scalar_select 0, %s8, %s6
  $region1: #{tpu_custom_call.1} parent=0
    #allocation3 [shape = 'u8[16384]{0}', space=vmem, size = 0x4000, scoped, tag = 'input window, operand 0']
    #allocation4 [shape = 's32[2]{0}', space=sflag, size = 0x8, scoped, tag = 'scoped memory for tpu_custom_call.1']
    #allocation5 [shape = 's32[2]{0}', space=sflag, size = 0x8, scoped, tag = 'scoped memory for tpu_custom_call.1']
    #allocation6 [shape = 'u8[196608]{0}', space=vmem, size = 0x30000, scoped, tag = 'input window, operand 1, single buffered']
    #allocation7 [shape = 's32[1]{0}', space=sflag, size = 0x4, scoped, tag = 'scoped memory for tpu_custom_call.1']
    #allocation8 [shape = 'u8[16384]{0}', space=vmem, size = 0x4000, scoped, tag = 'output window, operand 0']
    %10 = vsyncpa [#allocation4], 0
    %s11 = scalar_lea.sflag [#allocation4], 1
    %12 = vsyncpa %s11, 0
    %13 = vsyncpa [#allocation7], 0
    %14 = vsyncpa [#allocation5], 0
    %s15 = scalar_lea.sflag [#allocation5], 1
    %16 = vsyncpa %s15, 0
    loop: start=0, step=1, limit=18
    $region2: #{tpu_custom_call.1} parent=1 // loop_pre_header
      _
    $region3: #{tpu_custom_call.1} parent=1 // loop_header
      %s18 = sphi 0, %s22
      %p19 = scmp.ge.s32.totalorder %s18, 18
      %s25 = sphi 0, %s37
      %s26 = sphi 0, %s33
      %s27 = sphi 0, %s25
      %s28 = sphi 0, %s26
      %s29 = sphi 0, %s27
      %s30 = sphi 0, %s28
      %s42 = sphi 0, %s44
      %s45 = sphi 0, %s42
      %s46 = sphi 0, %s45
      %s62 = sphi 0, %s46
      %s66 = sphi 0, %s66
      %s68 = sphi 0, %s66
      %s69 = sphi 0, %s68
      %s83 = sphi 0, %s69
      %s87 = sphi 0, %s87
      %s89 = sphi 0, %s87
      %s90 = sphi 0, %s89
      %s104 = sphi 0, %s90
      %s108 = sphi 0, %s108
      %s110 = sphi 0, %s108
      %s111 = sphi 0, %s110
      %s125 = sphi 0, %s111
      %s129 = sphi 0, %s129
      %s131 = sphi 0, %s129
      %s132 = sphi 0, %s131
      %s146 = sphi 0, %s132
      %s154 = sphi 0, %s156
      %s157 = sphi 0, %s154
      %s158 = sphi 0, %s157
      %s174 = sphi 0, %s158
    $region4: #{tpu_custom_call.1} parent=1 // loop_header_branch
      %21 = sbr.rel (%p19) target = $region8
    $region5: #{tpu_custom_call.1} parent=1 // loop_body
      %s23 = ssub.s32 %s18, 1
      %s24 = ssub.s32 %s18, 2
      %s31 = sadd.s32 1, %s26
      %p32 = scmp.ge.s32.totalorder %s31, 4
      %s33 = scalar_select %p32, 0, %s31
      %s34 = sadd.s32 1, %s25
      %s35 = scalar_select %p32, %s34, %s25
      %p36 = scmp.ge.s32.totalorder %s35, 4
      %s37 = scalar_select %p36, 0, %s35
      %s38 = ssub.s32 %s25, %s37
      %s39 = ssub.s32 %s26, %s33
      %s40 = sor.u32 %s38, %s39
      %p41 = scmp.eq.s32.totalorder %s40, 0
      %s43 = sadd.s32 %s42, 1
      %s44 = scalar_select %p41, %s42, %s43
      %p47 = pneg %p41
      %p48 = scmp.eq.s32.totalorder %s18, 15
      %p49 = por %p47, %p48
      %p50 = scmp.ne.s32.totalorder %s42, %s45
      %p51 = scmp.eq.s32.totalorder %s18, 0
      %p52 = por %p50, %p51
      %p53 = scmp.ne.s32.totalorder %s42, %s45
      %p54 = scmp.eq.s32.totalorder %s23, 15
      %p55 = por %p53, %p54
      %p56 = scmp.ne.s32.totalorder %s45, %s46
      %p57 = scmp.eq.s32.totalorder %s23, 0
      %p58 = por %p56, %p57
      %p59 = scmp.ne.s32.totalorder %s45, %s46
      %p60 = scmp.eq.s32.totalorder %s24, 15
      %p61 = por %p59, %p60
      %p63 = scmp.ne.s32.totalorder %s46, %s62
      %p64 = scmp.eq.s32.totalorder %s24, 0
      %p65 = por %p63, %p64
      %s67 = sadd.s32 %s66, 1
      %p70 = scmp.eq.s32.totalorder %s18, 15
      %p71 = scmp.ne.s32.totalorder %s66, %s68
      %p72 = scmp.eq.s32.totalorder %s18, 0
      %p73 = por %p71, %p72
      %p74 = scmp.ne.s32.totalorder %s66, %s68
      %p75 = scmp.eq.s32.totalorder %s23, 15
      %p76 = por %p74, %p75
      %p77 = scmp.ne.s32.totalorder %s68, %s69
      %p78 = scmp.eq.s32.totalorder %s23, 0
      %p79 = por %p77, %p78
      %p80 = scmp.ne.s32.totalorder %s68, %s69
      %p81 = scmp.eq.s32.totalorder %s24, 15
      %p82 = por %p80, %p81
      %p84 = scmp.ne.s32.totalorder %s69, %s83
      %p85 = scmp.eq.s32.totalorder %s24, 0
      %p86 = por %p84, %p85
      %s88 = sadd.s32 %s87, 1
      %p91 = scmp.eq.s32.totalorder %s18, 15
      %p92 = scmp.ne.s32.totalorder %s87, %s89
      %p93 = scmp.eq.s32.totalorder %s18, 0
      %p94 = por %p92, %p93
      %p95 = scmp.ne.s32.totalorder %s87, %s89
      %p96 = scmp.eq.s32.totalorder %s23, 15
      %p97 = por %p95, %p96
      %p98 = scmp.ne.s32.totalorder %s89, %s90
      %p99 = scmp.eq.s32.totalorder %s23, 0
      %p100 = por %p98, %p99
      %p101 = scmp.ne.s32.totalorder %s89, %s90
      %p102 = scmp.eq.s32.totalorder %s24, 15
      %p103 = por %p101, %p102
      %p105 = scmp.ne.s32.totalorder %s90, %s104
      %p106 = scmp.eq.s32.totalorder %s24, 0
      %p107 = por %p105, %p106
      %s109 = sadd.s32 %s108, 1
      %p112 = scmp.eq.s32.totalorder %s18, 15
      %p113 = scmp.ne.s32.totalorder %s108, %s110
      %p114 = scmp.eq.s32.totalorder %s18, 0
      %p115 = por %p113, %p114
      %p116 = scmp.ne.s32.totalorder %s108, %s110
      %p117 = scmp.eq.s32.totalorder %s23, 15
      %p118 = por %p116, %p117
      %p119 = scmp.ne.s32.totalorder %s110, %s111
      %p120 = scmp.eq.s32.totalorder %s23, 0
      %p121 = por %p119, %p120
      %p122 = scmp.ne.s32.totalorder %s110, %s111
      %p123 = scmp.eq.s32.totalorder %s24, 15
      %p124 = por %p122, %p123
      %p126 = scmp.ne.s32.totalorder %s111, %s125
      %p127 = scmp.eq.s32.totalorder %s24, 0
      %p128 = por %p126, %p127
      %s130 = sadd.s32 %s129, 1
      %p133 = scmp.eq.s32.totalorder %s18, 15
      %p134 = scmp.ne.s32.totalorder %s129, %s131
      %p135 = scmp.eq.s32.totalorder %s18, 0
      %p136 = por %p134, %p135
      %p137 = scmp.ne.s32.totalorder %s129, %s131
      %p138 = scmp.eq.s32.totalorder %s23, 15
      %p139 = por %p137, %p138
      %p140 = scmp.ne.s32.totalorder %s131, %s132
      %p141 = scmp.eq.s32.totalorder %s23, 0
      %p142 = por %p140, %p141
      %p143 = scmp.ne.s32.totalorder %s131, %s132
      %p144 = scmp.eq.s32.totalorder %s24, 15
      %p145 = por %p143, %p144
      %p147 = scmp.ne.s32.totalorder %s132, %s146
      %p148 = scmp.eq.s32.totalorder %s24, 0
      %p149 = por %p147, %p148
      %s150 = ssub.s32 %s25, %s37
      %s151 = ssub.s32 %s26, %s33
      %s152 = sor.u32 %s150, %s151
      %p153 = scmp.eq.s32.totalorder %s152, 0
      %s155 = sadd.s32 %s154, 1
      %s156 = scalar_select %p153, %s154, %s155
      %p159 = pneg %p153
      %p160 = scmp.eq.s32.totalorder %s18, 15
      %p161 = por %p159, %p160
      %p162 = scmp.ne.s32.totalorder %s154, %s157
      %p163 = scmp.eq.s32.totalorder %s18, 0
      %p164 = por %p162, %p163
      %p165 = scmp.ne.s32.totalorder %s154, %s157
      %p166 = scmp.eq.s32.totalorder %s23, 15
      %p167 = por %p165, %p166
      %p168 = scmp.ne.s32.totalorder %s157, %s158
      %p169 = scmp.eq.s32.totalorder %s23, 0
      %p170 = por %p168, %p169
      %p171 = scmp.ne.s32.totalorder %s157, %s158
      %p172 = scmp.eq.s32.totalorder %s24, 15
      %p173 = por %p171, %p172
      %p175 = scmp.ne.s32.totalorder %s158, %s174
      %p176 = scmp.eq.s32.totalorder %s24, 0
      %p177 = por %p175, %p176
      %p178 = scmp.le.s32.totalorder 1, %s18
      %p179 = scmp.lt.s32.totalorder %s18, 17
      %p180 = pnand %p178, %p179
      %p181 = pneg %p180
      // Predicated region
      $region9: #{tpu_custom_call.1} parent=5 // pred_check
        _
      $region10: #{tpu_custom_call.1} parent=5 // pred_check_branch
        %183 = sbr.rel (%p180) target = $region12
      $region11: #{tpu_custom_call.1} parent=5 // pred_region
        %s184 = ssub.s32 %s18, 1
        // Predicated region
        $region13: #{tpu_custom_call.1} parent=11 // pred_check
          %p185 = pneg %p79
        $region14: #{tpu_custom_call.1} parent=11 // pred_check_branch
          %187 = sbr.rel (%p185) target = $region16
        $region15: #{tpu_custom_call.1} parent=11 // pred_region
          %s189 = ssub.s32 6144, 6144
          %190 = vsyncadd [#allocation7], %s189
          %s191 = sshll.u32 [#allocation6], 4
          %s192 = int_to_ptr.vmem [resolvable:$true] %s191
          %197 = dma.hbm_to_vmem [thread:$0]  %s1, 6144, %s192, [#allocation7], 128, 128, 8
        $region16: #{tpu_custom_call.1} parent=11 // pred_fallthru
          _
        // Predicated region
        $region17: #{tpu_custom_call.1} parent=11 // pred_check
          %p198 = pneg %p100
        $region18: #{tpu_custom_call.1} parent=11 // pred_check_branch
          %200 = sbr.rel (%p198) target = $region20
        $region19: #{tpu_custom_call.1} parent=11 // pred_region
          _
        $region20: #{tpu_custom_call.1} parent=11 // pred_fallthru
          _
        // Predicated region
        $region21: #{tpu_custom_call.1} parent=11 // pred_check
          %p201 = pneg %p121
        $region22: #{tpu_custom_call.1} parent=11 // pred_check_branch
          %203 = sbr.rel (%p201) target = $region24
        $region23: #{tpu_custom_call.1} parent=11 // pred_region
          _
        $region24: #{tpu_custom_call.1} parent=11 // pred_fallthru
          _
        // Predicated region
        $region25: #{tpu_custom_call.1} parent=11 // pred_check
          %p204 = pneg %p142
        $region26: #{tpu_custom_call.1} parent=11 // pred_check_branch
          %206 = sbr.rel (%p204) target = $region28
        $region27: #{tpu_custom_call.1} parent=11 // pred_region
          _
        $region28: #{tpu_custom_call.1} parent=11 // pred_fallthru
          _
      $region12: #{tpu_custom_call.1} parent=5 // pred_fallthru
        _
      %p207 = scmp.lt.s32.totalorder %s18, 16
      // Predicated region
      $region29: #{tpu_custom_call.1} parent=5 // pred_check
        %p208 = pneg %p207
      $region30: #{tpu_custom_call.1} parent=5 // pred_check_branch
        %210 = sbr.rel (%p208) target = $region32
      $region31: #{tpu_custom_call.1} parent=5 // pred_region
        // Predicated region
        $region33: #{tpu_custom_call.1} parent=31 // pred_check
          %p211 = pneg %p52
        $region34: #{tpu_custom_call.1} parent=31 // pred_check_branch
          %213 = sbr.rel (%p211) target = $region36
        $region35: #{tpu_custom_call.1} parent=31 // pred_region
          %s214 = sand.u32 %s42, 1
          %s215 = scalar_lea.sflag [#allocation4], %s214
          %s216 = sand.u32 %s42, 1
          %s217 = smul.addr %s216, 16
          %s218 = scalar_lea.vmem [#allocation3], %s217
          %s219 = smul.u32 2, %s26
          %s221 = ssub.s32 256, 256
          %222 = vsyncadd %s215, %s221
          %s223 = smul.addr %s25, 8
          %s224 = sadd.s32 %s219, %s223
          %s225 = smul.addr %s224, 128
          %s226 = scalar_lea.hbm %s0, %s225
          %s227 = sshll.u32 %s218, 4
          %s228 = int_to_ptr.vmem [resolvable:$true] %s227
          %233 = dma.hbm_to_vmem [thread:$0]  %s226, 256, %s228, %s215, 128, 128, 8
        $region36: #{tpu_custom_call.1} parent=31 // pred_fallthru
          _
      $region32: #{tpu_custom_call.1} parent=5 // pred_fallthru
        _
      %p234 = scmp.le.s32.totalorder 1, %s18
      %p235 = scmp.lt.s32.totalorder %s18, 17
      %p236 = pnand %p234, %p235
      %p237 = pneg %p236
      // Predicated region
      $region37: #{tpu_custom_call.1} parent=5 // pred_check
        _
      $region38: #{tpu_custom_call.1} parent=5 // pred_check_branch
        %239 = sbr.rel (%p236) target = $region40
      $region39: #{tpu_custom_call.1} parent=5 // pred_region
        %s240 = ssub.s32 %s18, 1
        %s241 = sand.u32 %s45, 1
        %s242 = scalar_lea.sflag [#allocation4], %s241
        %s243 = sand.u32 %s45, 1
        %s244 = smul.addr %s243, 16
        %s245 = scalar_lea.vmem [#allocation3], %s244
        // Predicated region
        $region41: #{tpu_custom_call.1} parent=39 // pred_check
          %p246 = pneg %p58
        $region42: #{tpu_custom_call.1} parent=39 // pred_check_branch
          %248 = sbr.rel (%p246) target = $region44
        $region43: #{tpu_custom_call.1} parent=39 // pred_region
          %249 = dma.done %s242, 256
        $region44: #{tpu_custom_call.1} parent=39 // pred_fallthru
          _
        // Predicated region
        $region45: #{tpu_custom_call.1} parent=39 // pred_check
          %p250 = pneg %p79
        $region46: #{tpu_custom_call.1} parent=39 // pred_check_branch
          %252 = sbr.rel (%p250) target = $region48
        $region47: #{tpu_custom_call.1} parent=39 // pred_region
          %253 = dma.done [#allocation7], 6144
        $region48: #{tpu_custom_call.1} parent=39 // pred_fallthru
          _
        %s254 = sand.u32 %s45, 1
        %s255 = scalar_lea.sflag [#allocation4], %s254
        %s256 = sand.u32 %s45, 1
        %s257 = smul.addr %s256, 16
        %s258 = scalar_lea.vmem [#allocation3], %s257
        %p259 = pneg %p58
        %p260 = pneg %p55
        %p261 = pneg %p79
        %p262 = pneg %p76
        %p263 = pneg %p100
        %p264 = pneg %p97
        %p265 = pneg %p121
        %p266 = pneg %p118
        %p267 = pneg %p142
        %p268 = pneg %p139
        %p269 = pneg %p170
        %p270 = pneg %p167
        %s271 = sand.u32 %s157, 1
        %s272 = scalar_lea.sflag [#allocation5], %s271
        %s273 = sand.u32 %s157, 1
        %s274 = smul.addr %s273, 16
        %s275 = scalar_lea.vmem [#allocation8], %s274
        %s276 = smul.u32 2, %s28
        %s277 = smul.u32 2, %s28
        %p278 = scmp.eq.s32.totalorder %s28, 0
        // Predicated region
        $region49: #{tpu_custom_call.1} parent=39 // pred_check
          %p279 = pneg %p278
        $region50: #{tpu_custom_call.1} parent=39 // pred_check_branch
          %281 = sbr.rel (%p279) target = $region52
        $region51: #{tpu_custom_call.1} parent=39 // pred_region
          %282 = vst [vmem:[#allocation2 + $0x6] sm:$0x3] 0.0
        $region52: #{tpu_custom_call.1} parent=39 // pred_fallthru
          _
        %p283 = scmp.gt.s32.totalorder %s28, 0
        // Predicated region
        $region53: #{tpu_custom_call.1} parent=39 // pred_check
          %p284 = pneg %p283
        $region54: #{tpu_custom_call.1} parent=39 // pred_check_branch
          %286 = sbr.rel (%p284) target = $region56
        $region55: #{tpu_custom_call.1} parent=39 // pred_region
          %v287 = vld [vmem:[#allocation2 + $0x16] sm:$0x3]
          %288 = vst [vmem:[#allocation2 + $0x6] sm:$0x3] %v287
        $region56: #{tpu_custom_call.1} parent=39 // pred_fallthru
          _
        %v289 = vld [vmem:[%s245] sm:$0xff]
        %v290 = vld [vmem:[%s245 + $0x8] sm:$0xff]
        %291 = vst [vmem:[#allocation2 + $0x8] sm:$0xff] %v289
        %292 = vst [vmem:[#allocation2 + $0x10] sm:$0xff] %v290
        %v293 = vld [vmem:[#allocation2 + $0x6] sm:$0xff]
        %v294 = vld [vmem:[#allocation2 + $0xe] sm:$0xff]
        %v295 = vld [vmem:[#allocation6] sm:$0xff]
        %v296 = vld [vmem:[#allocation6 + $0x8] sm:$0xff]
        %v297 = vld [vmem:[#allocation6 + $0x10] sm:$0xff]
        %v298 = vld [vmem:[#allocation6 + $0x18] sm:$0xff]
        %v299 = vld [vmem:[#allocation6 + $0x20] sm:$0xff]
        %v300 = vld [vmem:[#allocation6 + $0x28] sm:$0xff]
        %v301 = vld [vmem:[#allocation6 + $0x30] sm:$0xff]
        %v302 = vld [vmem:[#allocation6 + $0x38] sm:$0xff]
        %v303 = vld [vmem:[#allocation6 + $0x40] sm:$0xff]
        %v304 = vld [vmem:[#allocation6 + $0x48] sm:$0xff]
        %v305 = vld [vmem:[#allocation6 + $0x50] sm:$0xff]
        %v306 = vld [vmem:[#allocation6 + $0x58] sm:$0xff]
        %v307 = vld [vmem:[#allocation6 + $0x60] sm:$0xff]
        %v308 = vld [vmem:[#allocation6 + $0x68] sm:$0xff]
        %v309 = vld [vmem:[#allocation6 + $0x70] sm:$0xff]
        %v310 = vld [vmem:[#allocation6 + $0x78] sm:$0xff]
        %v311 = vld [vmem:[#allocation2 + $0x7] sm:$0xff]
        %v312 = vld [vmem:[#allocation2 + $0xf] sm:$0xff]
        %s313 = scalar_lea.vmem [#allocation6], 128
        %v314 = vld [vmem:[%s313] sm:$0xff]
        %v315 = vld [vmem:[%s313 + $0x8] sm:$0xff]
        %v316 = vld [vmem:[%s313 + $0x10] sm:$0xff]
        %v317 = vld [vmem:[%s313 + $0x18] sm:$0xff]
        %v318 = vld [vmem:[%s313 + $0x20] sm:$0xff]
        %v319 = vld [vmem:[%s313 + $0x28] sm:$0xff]
        %v320 = vld [vmem:[%s313 + $0x30] sm:$0xff]
        %v321 = vld [vmem:[%s313 + $0x38] sm:$0xff]
        %v322 = vld [vmem:[%s313 + $0x40] sm:$0xff]
        %v323 = vld [vmem:[%s313 + $0x48] sm:$0xff]
        %v324 = vld [vmem:[%s313 + $0x50] sm:$0xff]
        %v325 = vld [vmem:[%s313 + $0x58] sm:$0xff]
        %v326 = vld [vmem:[%s313 + $0x60] sm:$0xff]
        %v327 = vld [vmem:[%s313 + $0x68] sm:$0xff]
        %v328 = vld [vmem:[%s313 + $0x70] sm:$0xff]
        %v329 = vld [vmem:[%s313 + $0x78] sm:$0xff]
        %330 = vmatprep.subr.mxu0 0.0
        %331 = vmatpush1.msra.mxu0 %v314
        %332 = vmatprep.subr.mxu0 0.0
        %333 = vmatpush1.msra.mxu0 %v315
        %334 = vmatprep.subr.mxu0 0.0
        %335 = vmatpush1.msra.mxu0 %v316
        %336 = vmatprep.subr.mxu0 0.0
        %337 = vmatpush1.msra.mxu0 %v317
        %338 = vmatprep.subr.mxu0 0.0
        %339 = vmatpush1.msra.mxu0 %v318
        %340 = vmatprep.subr.mxu0 0.0
        %341 = vmatpush1.msra.mxu0 %v319
        %342 = vmatprep.subr.mxu0 0.0
        %343 = vmatpush1.msra.mxu0 %v320
        %344 = vmatprep.subr.mxu0 0.0
        %345 = vmatpush1.msra.mxu0 %v321
        %346 = vmatprep.subr.mxu0 0.0
        %347 = vmatpush1.msra.mxu0 %v322
        %348 = vmatprep.subr.mxu0 0.0
        %349 = vmatpush1.msra.mxu0 %v323
        %350 = vmatprep.subr.mxu0 0.0
        %351 = vmatpush1.msra.mxu0 %v324
        %352 = vmatprep.subr.mxu0 0.0
        %353 = vmatpush1.msra.mxu0 %v325
        %354 = vmatprep.subr.mxu0 0.0
        %355 = vmatpush1.msra.mxu0 %v326
        %356 = vmatprep.subr.mxu0 0.0
        %357 = vmatpush1.msra.mxu0 %v327
        %358 = vmatprep.subr.mxu0 0.0
        %359 = vmatpush1.msra.mxu0 %v328
        %360 = vmatprep.subr.mxu0 0.0
        %361 = vmatpush1.msra.mxu0 %v329
        %362 = vmatprep.subr.mxu0 0.0
        %363 = vmatpush1.msra.mxu0 0.0
        %364 = vmatprep.subr.mxu0 0.0
        %365 = vmatpush1.msra.mxu0 0.0
        %366 = vmatprep.subr.mxu0 0.0
        %367 = vmatpush1.msra.mxu0 0.0
        %368 = vmatprep.subr.mxu0 0.0
        %369 = vmatpush1.msra.mxu0 0.0
        %370 = vmatprep.subr.mxu0 0.0
        %371 = vmatpush1.msra.mxu0 0.0
        %372 = vmatprep.subr.mxu0 0.0
        %373 = vmatpush1.msra.mxu0 0.0
        %374 = vmatprep.subr.mxu0 0.0
        %375 = vmatpush1.msra.mxu0 0.0
        %376 = vmatprep.subr.mxu0 0.0
        %377 = vmatpush1.msra.mxu0 0.0
        %378 = vmatprep.subr.mxu0 0.0
        %379 = vmatpush1.msra.mxu0 0.0
        %380 = vmatprep.subr.mxu0 0.0
        %381 = vmatpush1.msra.mxu0 0.0
        %382 = vmatprep.subr.mxu0 0.0
        %383 = vmatpush1.msra.mxu0 0.0
        %384 = vmatprep.subr.mxu0 0.0
        %385 = vmatpush1.msra.mxu0 0.0
        %386 = vmatprep.subr.mxu0 0.0
        %387 = vmatpush1.msra.mxu0 0.0
        %388 = vmatprep.subr.mxu0 0.0
        %389 = vmatpush1.msra.mxu0 0.0
        %390 = vmatprep.subr.mxu0 0.0
        %391 = vmatpush1.msra.mxu0 0.0
        %392 = vmatprep.subr.mxu0 0.0
        %393 = vmatpush1.msra.mxu0 0.0
        %394 = vmatprep.mubr.f32.mxu0 0.0
        %395 = vmatmul.mubr.f32.gmra.mrb[0].mxu0 %v311
        %v396 = vpop.f32.mrb[0].mxu0
        %v397 = vadd.f32 0.0, %v396
        %v398 = vpop.f32.mrb[0].mxu0
        %399 = vmatprep.mubr.f32.mxu0 0.0
        %400 = vmatmul.mubr.f32.gmra.mrb[0].mxu0 %v312
        %v401 = vpop.f32.mrb[0].mxu0
        %v402 = vadd.f32 0.0, %v401
        %v403 = vpop.f32.mrb[0].mxu0
        %404 = vdwg.mxu0
        %405 = vmatprep.subr.mxu0 0.0
        %406 = vmatpush1.msra.mxu0 %v295
        %407 = vmatprep.subr.mxu0 0.0
        %408 = vmatpush1.msra.mxu0 %v296
        %409 = vmatprep.subr.mxu0 0.0
        %410 = vmatpush1.msra.mxu0 %v297
        %411 = vmatprep.subr.mxu0 0.0
        %412 = vmatpush1.msra.mxu0 %v298
        %413 = vmatprep.subr.mxu0 0.0
        %414 = vmatpush1.msra.mxu0 %v299
        %415 = vmatprep.subr.mxu0 0.0
        %416 = vmatpush1.msra.mxu0 %v300
        %417 = vmatprep.subr.mxu0 0.0
        %418 = vmatpush1.msra.mxu0 %v301
        %419 = vmatprep.subr.mxu0 0.0
        %420 = vmatpush1.msra.mxu0 %v302
        %421 = vmatprep.subr.mxu0 0.0
        %422 = vmatpush1.msra.mxu0 %v303
        %423 = vmatprep.subr.mxu0 0.0
        %424 = vmatpush1.msra.mxu0 %v304
        %425 = vmatprep.subr.mxu0 0.0
        %426 = vmatpush1.msra.mxu0 %v305
        %427 = vmatprep.subr.mxu0 0.0
        %428 = vmatpush1.msra.mxu0 %v306
        %429 = vmatprep.subr.mxu0 0.0
        %430 = vmatpush1.msra.mxu0 %v307
        %431 = vmatprep.subr.mxu0 0.0
        %432 = vmatpush1.msra.mxu0 %v308
        %433 = vmatprep.subr.mxu0 0.0
        %434 = vmatpush1.msra.mxu0 %v309
        %435 = vmatprep.subr.mxu0 0.0
        %436 = vmatpush1.msra.mxu0 %v310
        %437 = vmatprep.subr.mxu0 0.0
        %438 = vmatpush1.msra.mxu0 0.0
        %439 = vmatprep.subr.mxu0 0.0
        %440 = vmatpush1.msra.mxu0 0.0
        %441 = vmatprep.subr.mxu0 0.0
        %442 = vmatpush1.msra.mxu0 0.0
        %443 = vmatprep.subr.mxu0 0.0
        %444 = vmatpush1.msra.mxu0 0.0
        %445 = vmatprep.subr.mxu0 0.0
        %446 = vmatpush1.msra.mxu0 0.0
        %447 = vmatprep.subr.mxu0 0.0
        %448 = vmatpush1.msra.mxu0 0.0
        %449 = vmatprep.subr.mxu0 0.0
        %450 = vmatpush1.msra.mxu0 0.0
        %451 = vmatprep.subr.mxu0 0.0
        %452 = vmatpush1.msra.mxu0 0.0
        %453 = vmatprep.subr.mxu0 0.0
        %454 = vmatpush1.msra.mxu0 0.0
        %455 = vmatprep.subr.mxu0 0.0
        %456 = vmatpush1.msra.mxu0 0.0
        %457 = vmatprep.subr.mxu0 0.0
        %458 = vmatpush1.msra.mxu0 0.0
        %459 = vmatprep.subr.mxu0 0.0
        %460 = vmatpush1.msra.mxu0 0.0
        %461 = vmatprep.subr.mxu0 0.0
        %462 = vmatpush1.msra.mxu0 0.0
        %463 = vmatprep.subr.mxu0 0.0
        %464 = vmatpush1.msra.mxu0 0.0
        %465 = vmatprep.subr.mxu0 0.0
        %466 = vmatpush1.msra.mxu0 0.0
        %467 = vmatprep.subr.mxu0 0.0
        %468 = vmatpush1.msra.mxu0 0.0
        %469 = vmatprep.mubr.f32.mxu0 0.0
        %470 = vmatmul.mubr.f32.gmra.mrb[0].mxu0 %v293
        %v471 = vpop.f32.mrb[0].mxu0
        %v472 = vadd.f32 %v397, %v471
        %v473 = vpop.f32.mrb[0].mxu0
        %474 = vmatprep.mubr.f32.mxu0 0.0
        %475 = vmatmul.mubr.f32.gmra.mrb[0].mxu0 %v294
        %v476 = vpop.f32.mrb[0].mxu0
        %v477 = vadd.f32 %v402, %v476
        %v478 = vpop.f32.mrb[0].mxu0
        %479 = vdwg.mxu0
        %v480 = vld [vmem:[#allocation2 + $0x8] sm:$0xff]
        %v481 = vld [vmem:[#allocation2 + $0x10] sm:$0xff]
        %s482 = scalar_lea.vmem [#allocation6], 256
        %v483 = vld [vmem:[%s482] sm:$0xff]
        %v484 = vld [vmem:[%s482 + $0x8] sm:$0xff]
        %v485 = vld [vmem:[%s482 + $0x10] sm:$0xff]
        %v486 = vld [vmem:[%s482 + $0x18] sm:$0xff]
        %v487 = vld [vmem:[%s482 + $0x20] sm:$0xff]
        %v488 = vld [vmem:[%s482 + $0x28] sm:$0xff]
        %v489 = vld [vmem:[%s482 + $0x30] sm:$0xff]
        %v490 = vld [vmem:[%s482 + $0x38] sm:$0xff]
        %v491 = vld [vmem:[%s482 + $0x40] sm:$0xff]
        %v492 = vld [vmem:[%s482 + $0x48] sm:$0xff]
        %v493 = vld [vmem:[%s482 + $0x50] sm:$0xff]
        %v494 = vld [vmem:[%s482 + $0x58] sm:$0xff]
        %v495 = vld [vmem:[%s482 + $0x60] sm:$0xff]
        %v496 = vld [vmem:[%s482 + $0x68] sm:$0xff]
        %v497 = vld [vmem:[%s482 + $0x70] sm:$0xff]
        %v498 = vld [vmem:[%s482 + $0x78] sm:$0xff]
        %499 = vmatprep.subr.mxu0 0.0
        %500 = vmatpush1.msra.mxu0 %v483
        %501 = vmatprep.subr.mxu0 0.0
        %502 = vmatpush1.msra.mxu0 %v484
        %503 = vmatprep.subr.mxu0 0.0
        %504 = vmatpush1.msra.mxu0 %v485
        %505 = vmatprep.subr.mxu0 0.0
        %506 = vmatpush1.msra.mxu0 %v486
        %507 = vmatprep.subr.mxu0 0.0
        %508 = vmatpush1.msra.mxu0 %v487
        %509 = vmatprep.subr.mxu0 0.0
        %510 = vmatpush1.msra.mxu0 %v488
        %511 = vmatprep.subr.mxu0 0.0
        %512 = vmatpush1.msra.mxu0 %v489
        %513 = vmatprep.subr.mxu0 0.0
        %514 = vmatpush1.msra.mxu0 %v490
        %515 = vmatprep.subr.mxu0 0.0
        %516 = vmatpush1.msra.mxu0 %v491
        %517 = vmatprep.subr.mxu0 0.0
        %518 = vmatpush1.msra.mxu0 %v492
        %519 = vmatprep.subr.mxu0 0.0
        %520 = vmatpush1.msra.mxu0 %v493
        %521 = vmatprep.subr.mxu0 0.0
        %522 = vmatpush1.msra.mxu0 %v494
        %523 = vmatprep.subr.mxu0 0.0
        %524 = vmatpush1.msra.mxu0 %v495
        %525 = vmatprep.subr.mxu0 0.0
        %526 = vmatpush1.msra.mxu0 %v496
        %527 = vmatprep.subr.mxu0 0.0
        %528 = vmatpush1.msra.mxu0 %v497
        %529 = vmatprep.subr.mxu0 0.0
        %530 = vmatpush1.msra.mxu0 %v498
        %531 = vmatprep.subr.mxu0 0.0
        %532 = vmatpush1.msra.mxu0 0.0
        %533 = vmatprep.subr.mxu0 0.0
        %534 = vmatpush1.msra.mxu0 0.0
        %535 = vmatprep.subr.mxu0 0.0
        %536 = vmatpush1.msra.mxu0 0.0
        %537 = vmatprep.subr.mxu0 0.0
        %538 = vmatpush1.msra.mxu0 0.0
        %539 = vmatprep.subr.mxu0 0.0
        %540 = vmatpush1.msra.mxu0 0.0
        %541 = vmatprep.subr.mxu0 0.0
        %542 = vmatpush1.msra.mxu0 0.0
        %543 = vmatprep.subr.mxu0 0.0
        %544 = vmatpush1.msra.mxu0 0.0
        %545 = vmatprep.subr.mxu0 0.0
        %546 = vmatpush1.msra.mxu0 0.0
        %547 = vmatprep.subr.mxu0 0.0
        %548 = vmatpush1.msra.mxu0 0.0
        %549 = vmatprep.subr.mxu0 0.0
        %550 = vmatpush1.msra.mxu0 0.0
        %551 = vmatprep.subr.mxu0 0.0
        %552 = vmatpush1.msra.mxu0 0.0
        %553 = vmatprep.subr.mxu0 0.0
        %554 = vmatpush1.msra.mxu0 0.0
        %555 = vmatprep.subr.mxu0 0.0
        %556 = vmatpush1.msra.mxu0 0.0
        %557 = vmatprep.subr.mxu0 0.0
        %558 = vmatpush1.msra.mxu0 0.0
        %559 = vmatprep.subr.mxu0 0.0
        %560 = vmatpush1.msra.mxu0 0.0
        %561 = vmatprep.subr.mxu0 0.0
        %562 = vmatpush1.msra.mxu0 0.0
        %563 = vmatprep.mubr.f32.mxu0 0.0
        %564 = vmatmul.mubr.f32.gmra.mrb[0].mxu0 %v480
        %v565 = vpop.f32.mrb[0].mxu0
        %v566 = vadd.f32 0.0, %v565
        %v567 = vpop.f32.mrb[0].mxu0
        %568 = vmatprep.mubr.f32.mxu0 0.0
        %569 = vmatmul.mubr.f32.gmra.mrb[0].mxu0 %v481
        %v570 = vpop.f32.mrb[0].mxu0
        %v571 = vadd.f32 0.0, %v570
        %v572 = vpop.f32.mrb[0].mxu0
        %573 = vdwg.mxu0
        %v574 = vadd.f32 %v472, %v566
        %v575 = vadd.f32 %v477, %v571
        %v576 = vld [vmem:[%s2] sm:$0x1]
        %v578 = vlaneseq
        %v579 = vshrl.u32 %v578, 7
        %v580 = vsub.s32 0, %v579
        %v581 = vrot.slane %v576, %v580
        %v583 = vadd.f32 %v574, %v581
        %v584 = vadd.f32 %v575, %v581
        %v585 = vld [vmem:[%s245] sm:$0xff]
        %v586 = vld [vmem:[%s245 + $0x8] sm:$0xff]
        %v587 = vld [vmem:[%s3] sm:$0x1]
        %v588 = vld [vmem:[%s4] sm:$0x1]
        %589 = vadd.xlane.f32.xlu0 %v583
        %v590 = vpop.xlane.xlu0 %589
        %591 = vadd.xlane.f32.xlu0 %v584
        %v592 = vpop.xlane.xlu0 %591
        %v593 = vrcp.pop 128.0
        %v594 = vmul.f32 %v590, %v593
        %v595 = vmul.f32 %v592, %v593
        %v596 = vsub.f32 %v583, %v594
        %v597 = vsub.f32 %v584, %v595
        %v598 = vmul.f32 %v596, %v596
        %v599 = vmul.f32 %v597, %v597
        %600 = vadd.xlane.f32.xlu0 %v598
        %v601 = vpop.xlane.xlu0 %600
        %602 = vadd.xlane.f32.xlu0 %v599
        %v603 = vpop.xlane.xlu0 %602
        %v604 = vmul.f32 %v601, %v593
        %v605 = vmul.f32 %v603, %v593
        %v606 = vadd.f32 %v604, 1e-05
        %v607 = vadd.f32 %v605, 1e-05
        %v608 = vrsqrt.pop %v606
        %v609 = vrsqrt.pop %v607
        %v610 = vmul.f32 %v596, %v608
        %v611 = vmul.f32 %v597, %v609
        %v613 = vlaneseq
        %v614 = vshrl.u32 %v613, 7
        %v615 = vsub.s32 0, %v614
        %v616 = vrot.slane %v587, %v615
        %v618 = vmul.f32 %v610, %v616
        %v619 = vmul.f32 %v611, %v616
        %v621 = vlaneseq
        %v622 = vshrl.u32 %v621, 7
        %v623 = vsub.s32 0, %v622
        %v624 = vrot.slane %v588, %v623
        %v626 = vadd.f32 %v618, %v624
        %v627 = vadd.f32 %v619, %v624
        %v628 = vmul.f32 %v626, %v585
        %v629 = vmul.f32 %v627, %v586
        %630 = vst [vmem:[%s275] sm:$0xff] %v628
        %631 = vst [vmem:[%s275 + $0x8] sm:$0xff] %v629
        %s632 = sand.u32 %s157, 1
        %s633 = scalar_lea.sflag [#allocation5], %s632
        %s634 = sand.u32 %s157, 1
        %s635 = smul.addr %s634, 16
        %s636 = scalar_lea.vmem [#allocation8], %s635
        // Predicated region
        $region57: #{tpu_custom_call.1} parent=39 // pred_check
          %p637 = pneg %p167
        $region58: #{tpu_custom_call.1} parent=39 // pred_check_branch
          %639 = sbr.rel (%p637) target = $region60
        $region59: #{tpu_custom_call.1} parent=39 // pred_region
          %s640 = smul.u32 2, %s28
          %s642 = ssub.s32 256, 256
          %643 = vsyncadd %s633, %s642
          %s644 = smul.addr %s27, 8
          %s645 = sadd.s32 %s640, %s644
          %s646 = smul.addr %s645, 128
          %s647 = scalar_lea.hbm %s5, %s646
          %s648 = sshll.u32 %s636, 4
          %s649 = int_to_ptr.vmem [resolvable:$true] %s648
          %654 = dma.vmem_to_hbm [thread:$0]  %s649, 256, %s647, %s633, 128, 128, 8
        $region60: #{tpu_custom_call.1} parent=39 // pred_fallthru
          _
      $region40: #{tpu_custom_call.1} parent=5 // pred_fallthru
        _
      %p655 = scmp.le.s32.totalorder 2, %s18
      // Predicated region
      $region61: #{tpu_custom_call.1} parent=5 // pred_check
        %p656 = pneg %p655
      $region62: #{tpu_custom_call.1} parent=5 // pred_check_branch
        %658 = sbr.rel (%p656) target = $region64
      $region63: #{tpu_custom_call.1} parent=5 // pred_region
        %s659 = ssub.s32 %s18, 2
        // Predicated region
        $region65: #{tpu_custom_call.1} parent=63 // pred_check
          %p660 = pneg %p173
        $region66: #{tpu_custom_call.1} parent=63 // pred_check_branch
          %662 = sbr.rel (%p660) target = $region68
        $region67: #{tpu_custom_call.1} parent=63 // pred_region
          %s663 = sand.u32 %s158, 1
          %s664 = scalar_lea.sflag [#allocation5], %s663
          %s665 = sand.u32 %s158, 1
          %s666 = smul.addr %s665, 16
          %s667 = scalar_lea.vmem [#allocation8], %s666
          %668 = dma.done %s664, 256
        $region68: #{tpu_custom_call.1} parent=63 // pred_fallthru
          _
      $region64: #{tpu_custom_call.1} parent=5 // pred_fallthru
        _
    $region6: #{tpu_custom_call.1} parent=1 // loop_footer
      %s22 = sadd.s32 1, %s18
    $region7: #{tpu_custom_call.1} parent=1 // loop_footer_branch
      %17 = sbr.rel target = $region3
    $region8: #{tpu_custom_call.1} parent=1 // loop_exit
      _
    %669 = vsyncpa [#allocation4], 1
    %s670 = scalar_lea.sflag [#allocation4], 1
    %671 = vsyncpa %s670, 1
    %672 = vsyncpa [#allocation7], 1
    %673 = vsyncpa [#allocation5], 1
    %s674 = scalar_lea.sflag [#allocation5], 1
    %675 = vsyncpa %s674, 1

</llo_original>
